<compile_context>
chip_gen: v5e
topology: v5e:2x2
jax: 0.10.0
libtpu: 0.0.40
codegen_flags: <defaults>
</compile_context>

<pallas_src>
import functools

import jax
import jax.numpy as jnp
from jax.experimental import pallas as pl
from jax.experimental.pallas import tpu as pltpu


def _round_up(n, m):
    return ((n + m - 1) // m) * m


def _block_diag(a, b):
    """[[a, 0], [0, b]] — exact (adds 0.0 contributions only)."""
    ra, ca = a.shape
    rb, cb = b.shape
    top = jnp.concatenate([a, jnp.zeros((ra, cb), a.dtype)], axis=1)
    bot = jnp.concatenate([jnp.zeros((rb, ca), b.dtype), b], axis=1)
    return jnp.concatenate([top, bot], axis=0)


def _mtl_kernel(n_tasks,
                xT_ref,
                w_inT_ref, b_inT_ref,
                w_headT_ref, b_headT_ref,
                w_bd2T_ref, b_bd2T_ref,
                w_bd3T_ref, b_bd3T_ref,
                out_ref):
    # Single-EUP sigmoid: sigmoid(v) = 0.5 * tanh(0.5 * v) + 0.5
    def sig(v):
        return jnp.tanh(v * 0.5) * 0.5 + 0.5

    xT = xT_ref[...]                                             # [F, TILE_B]

    # Shared trunk: input_layer (batch on lanes -> lane-dense intermediates).
    hT = sig(jnp.dot(w_inT_ref[...], xT,
                     preferred_element_type=jnp.float32) + b_inT_ref[...])

    # Fused heads: rows = [W2a ; W3a ; W_out].
    headT = sig(jnp.dot(w_headT_ref[...], hT,
                        preferred_element_type=jnp.float32) + b_headT_ref[...])

    # o1 rows live after the task rows (sublane offset = n_tasks, mult. of 8).
    o1T = headT[n_tasks:, :]                                     # [n1, TILE_B]

    # Fused second Linear+Sigmoid of both task branches. w_bd2T is
    # zero-extended over the o1 rows so headT is consumed directly (no
    # realign slice in front of the MXU operand).
    s2T = sig(jnp.dot(w_bd2T_ref[...], headT,
                      preferred_element_type=jnp.float32) + b_bd2T_ref[...])

    # Fused final Linear (no activation) of both task branches.
    o34T = (jnp.dot(w_bd3T_ref[...], s2T,
                    preferred_element_type=jnp.float32) + b_bd3T_ref[...])

    # One lane-dense output slab: rows = [o1 ; o3 ; o4].
    out_ref[...] = jnp.concatenate([o1T, o34T], axis=0).astype(out_ref.dtype)


def mtl_network_c_forward(x, params, *, tile_b=2048):
    """x: [B, feature_size] float32. params: dict of [in,out] weights, [1,out] biases."""
    B, F = x.shape
    H = params["w_in"].shape[1]
    n1 = params["w_out"].shape[1]
    n2 = params["w2c"].shape[1]
    n3 = params["w3c"].shape[1]
    t1 = params["w2a"].shape[1]
    t2 = params["w3a"].shape[1]
    n_tasks = t1 + t2
    n_head = n_tasks + n1
    n_total = n1 + n2 + n3

    # --- one-time weight fusion, transposed to [out, in] (outside the kernel) ---
    w_inT = params["w_in"].T                                         # [H, F]
    b_inT = params["b_in"].T                                         # [H, 1]
    # Head rows ordered [W2a ; W3a ; W_out] so task rows start at sublane 0.
    w_headT = jnp.concatenate(
        [params["w2a"].T, params["w3a"].T, params["w_out"].T], axis=0)   # [n_head, H]
    b_headT = jnp.concatenate(
        [params["b2a"].T, params["b3a"].T, params["b_out"].T], axis=0)   # [n_head, 1]
    # Stage-2 block-diag, zero-extended over the o1 rows of headT (exact).
    w_bd2T = jnp.concatenate(
        [_block_diag(params["w2b"].T, params["w3b"].T),
         jnp.zeros((n_tasks, n1), jnp.float32)], axis=1)             # [n_tasks, n_head]
    b_bd2T = jnp.concatenate([params["b2b"].T, params["b3b"].T], axis=0)  # [n_tasks, 1]
    w_bd3T = _block_diag(params["w2c"].T, params["w3c"].T)           # [n2+n3, n_tasks]
    b_bd3T = jnp.concatenate([params["b2c"].T, params["b3c"].T], axis=0)  # [n2+n3, 1]

    # --- batch-on-lanes tiling: TILE_B columns per grid step (multiple of 128) ---
    b_128 = _round_up(max(B, 1), 128)
    tb = max(128, (min(tile_b, b_128) // 128) * 128)
    # v7x has 2 TensorCores: when the padded batch allows it, keep >= 2
    # parallel grid steps so both cores get work.
    if b_128 >= 256 and 2 * tb > b_128:
        tb = _round_up(b_128 // 2, 128)
    b_pad = _round_up(b_128, tb)
    grid = (b_pad // tb,)

    # Layout plumbing in the wrapper: present x as [F, b_pad] (batch on lanes).
    x_t = x.T
    if b_pad != B:
        x_t = jnp.pad(x_t, ((0, 0), (0, b_pad - B)))

    weights = (w_inT, b_inT, w_headT, b_headT, w_bd2T, b_bd2T, w_bd3T, b_bd3T)

    def const_spec(a):
        return pl.BlockSpec(a.shape, lambda i: (0, 0))

    # Advisory cost estimate so XLA schedules the custom call sensibly.
    flops = 2 * b_pad * (F * H + H * n_head + n_head * n_tasks
                         + n_tasks * (n2 + n3))
    transcendentals = b_pad * (H + n_head + n_tasks)
    bytes_accessed = 4 * (b_pad * F + b_pad * n_total
                          + sum(int(w.size) for w in weights))
    cost = pl.CostEstimate(flops=flops, transcendentals=transcendentals,
                           bytes_accessed=bytes_accessed)

    slabT = pl.pallas_call(
        functools.partial(_mtl_kernel, n_tasks),
        out_shape=jax.ShapeDtypeStruct((n_total, b_pad), jnp.float32),
        grid=grid,
        in_specs=[pl.BlockSpec((F, tb), lambda i: (0, i))]
                 + [const_spec(w) for w in weights],
        out_specs=pl.BlockSpec((n_total, tb), lambda i: (0, i)),
        compiler_params=pltpu.CompilerParams(
            dimension_semantics=("parallel",)),
        cost_estimate=cost,
    )(x_t, *weights)

    # Slice off batch padding and transpose back to [B, n_*].
    o1 = slabT[:n1, :B].T
    o3 = slabT[n1:n1 + n2, :B].T
    o4 = slabT[n1 + n2:, :B].T
    # out2 == out1 by construction (same output_layer applied twice).
    return o1, o1, o3, o4


def init_params(key, feature_size, hidden_layer_size, task_layer1, task_layer2,
                n_output_1, n_output_2, n_output_3):
    """Deterministic init mimicking PyTorch Linear default (U[-1/sqrt(in), 1/sqrt(in)]).
    Weights stored as [in, out]; biases as [1, out]."""
    layer_dims = {
        "_in":  (feature_size, hidden_layer_size),
        "_out": (hidden_layer_size, n_output_1),
        "2a":   (hidden_layer_size, task_layer1),
        "2b":   (task_layer1, task_layer1),
        "2c":   (task_layer1, n_output_2),
        "3a":   (hidden_layer_size, task_layer2),
        "3b":   (task_layer2, task_layer2),
        "3c":   (task_layer2, n_output_3),
    }
    params = {}
    for name, (fan_in, fan_out) in layer_dims.items():
        key, kw, kb = jax.random.split(key, 3)
        bound = 1.0 / jnp.sqrt(float(fan_in))
        params[f"w{name}"] = jax.random.uniform(
            kw, (fan_in, fan_out), jnp.float32, minval=-bound, maxval=bound)
        params[f"b{name}"] = jax.random.uniform(
            kb, (1, fan_out), jnp.float32, minval=-bound, maxval=bound)
    return params


def _reference(x, params):
    """Plain-JAX reference for sanity check."""
    sig = jax.nn.sigmoid
    h = sig(x @ params["w_in"] + params["b_in"])
    o1 = sig(h @ params["w_out"] + params["b_out"])
    t2 = sig(h @ params["w2a"] + params["b2a"])
    t2 = sig(t2 @ params["w2b"] + params["b2b"])
    o3 = t2 @ params["w2c"] + params["b2c"]
    t3 = sig(h @ params["w3a"] + params["b3a"])
    t3 = sig(t3 @ params["w3b"] + params["b3b"])
    o4 = t3 @ params["w3c"] + params["b3c"]
    return o1, o1, o3, o4


if __name__ == "__main__":
    # Small shapes consistent with the module's constructor.
    feature_size = 16
    hidden_layer_size = 32
    task_layer1 = 16
    task_layer2 = 16
    n_output_1 = 4
    n_output_2 = 4
    n_output_3 = 4
    batch = 8

    key = jax.random.PRNGKey(0)
    key, kx = jax.random.split(key)
    x = jax.random.normal(kx, (batch, feature_size), jnp.float32)

    params = init_params(key, feature_size, hidden_layer_size, task_layer1,
                         task_layer2, n_output_1, n_output_2, n_output_3)

    outs = mtl_network_c_forward(x, params)
    outs = jax.block_until_ready(outs)

    refs = _reference(x, params)
    for o, r in zip(outs, refs):
        assert o.shape == r.shape, (o.shape, r.shape)
        assert jnp.allclose(o, r, atol=5e-5, rtol=1e-5), float(jnp.abs(o - r).max())

    print("KERNEL_OK")
</pallas_src>

<mosaic_0001>
module attributes {stable_mosaic.version = 11 : i64} {
  func.func @_mtl_kernel(%arg0: i32, %arg1: memref<16x128xf32, #tpu.memory_space<vmem>>, %arg2: memref<32x16xf32, #tpu.memory_space<vmem>>, %arg3: memref<32x1xf32, #tpu.memory_space<vmem>>, %arg4: memref<36x32xf32, #tpu.memory_space<vmem>>, %arg5: memref<36x1xf32, #tpu.memory_space<vmem>>, %arg6: memref<32x36xf32, #tpu.memory_space<vmem>>, %arg7: memref<32x1xf32, #tpu.memory_space<vmem>>, %arg8: memref<8x32xf32, #tpu.memory_space<vmem>>, %arg9: memref<8x1xf32, #tpu.memory_space<vmem>>, %arg10: memref<12x128xf32, #tpu.memory_space<vmem>>) attributes {dimension_semantics = [#tpu.dimension_semantics<parallel>], iteration_bounds = array<i64: 1>, scalar_prefetch = 0 : i64, scratch_operands = 0 : i64, tpu.core_type = #tpu.core_type<tc>, window_params = [{transform_indices = @transform_0, window_bounds = array<i64: 16, 128>}, {pipeline_mode = #tpu.pipeline_mode<synchronous>, transform_indices = @transform_1, window_bounds = array<i64: 32, 16>}, {pipeline_mode = #tpu.pipeline_mode<synchronous>, transform_indices = @transform_2, window_bounds = array<i64: 32, 1>}, {pipeline_mode = #tpu.pipeline_mode<synchronous>, transform_indices = @transform_3, window_bounds = array<i64: 36, 32>}, {pipeline_mode = #tpu.pipeline_mode<synchronous>, transform_indices = @transform_4, window_bounds = array<i64: 36, 1>}, {pipeline_mode = #tpu.pipeline_mode<synchronous>, transform_indices = @transform_5, window_bounds = array<i64: 32, 36>}, {pipeline_mode = #tpu.pipeline_mode<synchronous>, transform_indices = @transform_6, window_bounds = array<i64: 32, 1>}, {pipeline_mode = #tpu.pipeline_mode<synchronous>, transform_indices = @transform_7, window_bounds = array<i64: 8, 32>}, {pipeline_mode = #tpu.pipeline_mode<synchronous>, transform_indices = @transform_8, window_bounds = array<i64: 8, 1>}, {transform_indices = @transform_9, window_bounds = array<i64: 12, 128>}]} {
    %c0 = arith.constant 0 : index
    %c0_0 = arith.constant 0 : index
    %0 = vector.load %arg1[%c0, %c0_0] : memref<16x128xf32, #tpu.memory_space<vmem>>, vector<16x128xf32>
    %c0_1 = arith.constant 0 : index
    %c0_2 = arith.constant 0 : index
    %1 = vector.load %arg2[%c0_1, %c0_2] : memref<32x16xf32, #tpu.memory_space<vmem>>, vector<32x16xf32>
    %cst = arith.constant dense<0.000000e+00> : vector<32x128xf32>
    %2 = tpu.matmul %1, %0, %cst {dimension_numbers = #tpu.dot_dimension_numbers<[1], [0], [0], [1], [0, 0, 1, 1], [], []>} : vector<32x16xf32>, vector<16x128xf32>, vector<32x128xf32> -> vector<32x128xf32>
    %c0_3 = arith.constant 0 : index
    %c0_4 = arith.constant 0 : index
    %3 = vector.load %arg3[%c0_3, %c0_4] : memref<32x1xf32, #tpu.memory_space<vmem>>, vector<32x1xf32>
    %4 = vector.broadcast %3 : vector<32x1xf32> to vector<32x128xf32>
    %5 = arith.addf %2, %4 : vector<32x128xf32>
    %cst_5 = arith.constant 5.000000e-01 : f32
    %6 = vector.broadcast %cst_5 : f32 to vector<32x128xf32>
    %7 = arith.mulf %5, %6 : vector<32x128xf32>
    %8 = math.tanh %7 : vector<32x128xf32>
    %cst_6 = arith.constant 5.000000e-01 : f32
    %9 = vector.broadcast %cst_6 : f32 to vector<32x128xf32>
    %10 = arith.mulf %8, %9 : vector<32x128xf32>
    %cst_7 = arith.constant 5.000000e-01 : f32
    %11 = vector.broadcast %cst_7 : f32 to vector<32x128xf32>
    %12 = arith.addf %10, %11 : vector<32x128xf32>
    %c0_8 = arith.constant 0 : index
    %c0_9 = arith.constant 0 : index
    %13 = vector.load %arg4[%c0_8, %c0_9] : memref<36x32xf32, #tpu.memory_space<vmem>>, vector<36x32xf32>
    %cst_10 = arith.constant dense<0.000000e+00> : vector<36x128xf32>
    %14 = tpu.matmul %13, %12, %cst_10 {dimension_numbers = #tpu.dot_dimension_numbers<[1], [0], [0], [1], [0, 0, 1, 1], [], []>} : vector<36x32xf32>, vector<32x128xf32>, vector<36x128xf32> -> vector<36x128xf32>
    %c0_11 = arith.constant 0 : index
    %c0_12 = arith.constant 0 : index
    %15 = vector.load %arg5[%c0_11, %c0_12] : memref<36x1xf32, #tpu.memory_space<vmem>>, vector<36x1xf32>
    %16 = vector.broadcast %15 : vector<36x1xf32> to vector<36x128xf32>
    %17 = arith.addf %14, %16 : vector<36x128xf32>
    %cst_13 = arith.constant 5.000000e-01 : f32
    %18 = vector.broadcast %cst_13 : f32 to vector<36x128xf32>
    %19 = arith.mulf %17, %18 : vector<36x128xf32>
    %20 = math.tanh %19 : vector<36x128xf32>
    %cst_14 = arith.constant 5.000000e-01 : f32
    %21 = vector.broadcast %cst_14 : f32 to vector<36x128xf32>
    %22 = arith.mulf %20, %21 : vector<36x128xf32>
    %cst_15 = arith.constant 5.000000e-01 : f32
    %23 = vector.broadcast %cst_15 : f32 to vector<36x128xf32>
    %24 = arith.addf %22, %23 : vector<36x128xf32>
    %25 = vector.extract_strided_slice %24 {offsets = [32, 0], sizes = [4, 128], strides = [1, 1]} : vector<36x128xf32> to vector<4x128xf32>
    %c0_16 = arith.constant 0 : index
    %c0_17 = arith.constant 0 : index
    %26 = vector.load %arg6[%c0_16, %c0_17] : memref<32x36xf32, #tpu.memory_space<vmem>>, vector<32x36xf32>
    %cst_18 = arith.constant dense<0.000000e+00> : vector<32x128xf32>
    %27 = tpu.matmul %26, %24, %cst_18 {dimension_numbers = #tpu.dot_dimension_numbers<[1], [0], [0], [1], [0, 0, 1, 1], [], []>} : vector<32x36xf32>, vector<36x128xf32>, vector<32x128xf32> -> vector<32x128xf32>
    %c0_19 = arith.constant 0 : index
    %c0_20 = arith.constant 0 : index
    %28 = vector.load %arg7[%c0_19, %c0_20] : memref<32x1xf32, #tpu.memory_space<vmem>>, vector<32x1xf32>
    %29 = vector.broadcast %28 : vector<32x1xf32> to vector<32x128xf32>
    %30 = arith.addf %27, %29 : vector<32x128xf32>
    %cst_21 = arith.constant 5.000000e-01 : f32
    %31 = vector.broadcast %cst_21 : f32 to vector<32x128xf32>
    %32 = arith.mulf %30, %31 : vector<32x128xf32>
    %33 = math.tanh %32 : vector<32x128xf32>
    %cst_22 = arith.constant 5.000000e-01 : f32
    %34 = vector.broadcast %cst_22 : f32 to vector<32x128xf32>
    %35 = arith.mulf %33, %34 : vector<32x128xf32>
    %cst_23 = arith.constant 5.000000e-01 : f32
    %36 = vector.broadcast %cst_23 : f32 to vector<32x128xf32>
    %37 = arith.addf %35, %36 : vector<32x128xf32>
    %c0_24 = arith.constant 0 : index
    %c0_25 = arith.constant 0 : index
    %38 = vector.load %arg8[%c0_24, %c0_25] : memref<8x32xf32, #tpu.memory_space<vmem>>, vector<8x32xf32>
    %cst_26 = arith.constant dense<0.000000e+00> : vector<8x128xf32>
    %39 = tpu.matmul %38, %37, %cst_26 {dimension_numbers = #tpu.dot_dimension_numbers<[1], [0], [0], [1], [0, 0, 1, 1], [], []>} : vector<8x32xf32>, vector<32x128xf32>, vector<8x128xf32> -> vector<8x128xf32>
    %c0_27 = arith.constant 0 : index
    %c0_28 = arith.constant 0 : index
    %40 = vector.load %arg9[%c0_27, %c0_28] : memref<8x1xf32, #tpu.memory_space<vmem>>, vector<8x1xf32>
    %41 = vector.broadcast %40 : vector<8x1xf32> to vector<8x128xf32>
    %42 = arith.addf %39, %41 : vector<8x128xf32>
    %43 = tpu.concatenate %25, %42 in 0 : vector<4x128xf32>, vector<8x128xf32> -> vector<12x128xf32>
    %c0_29 = arith.constant 0 : index
    %c0_30 = arith.constant 0 : index
    %44 = vector.load %arg10[%c0_29, %c0_30] : memref<12x128xf32, #tpu.memory_space<vmem>>, vector<12x128xf32>
    tpu.vector_store %arg10[%c0_29, %c0_30], %43 {strides = array<i32>} : memref<12x128xf32, #tpu.memory_space<vmem>>, vector<12x128xf32>,
    return
  }
  func.func @transform_0(%arg0: i32) -> (i32, i32) {
    %c0_i32 = arith.constant 0 : i32
    %c0_i32_0 = arith.constant 0 : i32
    return %c0_i32, %arg0 : i32, i32
  }
  func.func @transform_1(%arg0: i32) -> (i32, i32) {
    %c0_i32 = arith.constant 0 : i32
    %c0_i32_0 = arith.constant 0 : i32
    %c0_i32_1 = arith.constant 0 : i32
    return %c0_i32, %c0_i32_0 : i32, i32
  }
  func.func @transform_2(%arg0: i32) -> (i32, i32) {
    %c0_i32 = arith.constant 0 : i32
    %c0_i32_0 = arith.constant 0 : i32
    %c0_i32_1 = arith.constant 0 : i32
    return %c0_i32, %c0_i32_0 : i32, i32
  }
  func.func @transform_3(%arg0: i32) -> (i32, i32) {
    %c0_i32 = arith.constant 0 : i32
    %c0_i32_0 = arith.constant 0 : i32
    %c0_i32_1 = arith.constant 0 : i32
    return %c0_i32, %c0_i32_0 : i32, i32
  }
  func.func @transform_4(%arg0: i32) -> (i32, i32) {
    %c0_i32 = arith.constant 0 : i32
    %c0_i32_0 = arith.constant 0 : i32
    %c0_i32_1 = arith.constant 0 : i32
    return %c0_i32, %c0_i32_0 : i32, i32
  }
  func.func @transform_5(%arg0: i32) -> (i32, i32) {
    %c0_i32 = arith.constant 0 : i32
    %c0_i32_0 = arith.constant 0 : i32
    %c0_i32_1 = arith.constant 0 : i32
    return %c0_i32, %c0_i32_0 : i32, i32
  }
  func.func @transform_6(%arg0: i32) -> (i32, i32) {
    %c0_i32 = arith.constant 0 : i32
    %c0_i32_0 = arith.constant 0 : i32
    %c0_i32_1 = arith.constant 0 : i32
    return %c0_i32, %c0_i32_0 : i32, i32
  }
  func.func @transform_7(%arg0: i32) -> (i32, i32) {
    %c0_i32 = arith.constant 0 : i32
    %c0_i32_0 = arith.constant 0 : i32
    %c0_i32_1 = arith.constant 0 : i32
    return %c0_i32, %c0_i32_0 : i32, i32
  }
  func.func @transform_8(%arg0: i32) -> (i32, i32) {
    %c0_i32 = arith.constant 0 : i32
    %c0_i32_0 = arith.constant 0 : i32
    %c0_i32_1 = arith.constant 0 : i32
    return %c0_i32, %c0_i32_0 : i32, i32
  }
  func.func @transform_9(%arg0: i32) -> (i32, i32) {
    %c0_i32 = arith.constant 0 : i32
    %c0_i32_0 = arith.constant 0 : i32
    return %c0_i32, %arg0 : i32, i32
  }
}

</mosaic_0001>

<llo_original>
// kernel: tpu_custom_call.1
$region0: #{tpu_custom_call.1}
  #allocation0 [shape = 'u32[]', space=smem, size = 0x4, offset = 0x4, fixed_abs, tag = 'smem constant byte address 0x4 - core index']
  #allocation1 [shape = 'u32[72,128]{1,0:T(1,128)}', space=vmem, size = 0x9000, scoped, tag = 'internal scratch']
  %s0 = inlined_call_operand.vmem [shape: f32[16,128], index: 0, kind: input, shape index: {}]
  %s1 = inlined_call_operand.vmem [shape: f32[32,16], index: 1, kind: input, shape index: {}]
  %s2 = inlined_call_operand.vmem [shape: f32[32,1], index: 2, kind: input, shape index: {}]
  %s3 = inlined_call_operand.vmem [shape: f32[36,32], index: 3, kind: input, shape index: {}]
  %s4 = inlined_call_operand.vmem [shape: f32[36,1], index: 4, kind: input, shape index: {}]
  %s5 = inlined_call_operand.vmem [shape: f32[32,36], index: 5, kind: input, shape index: {}]
  %s6 = inlined_call_operand.vmem [shape: f32[32,1], index: 6, kind: input, shape index: {}]
  %s7 = inlined_call_operand.vmem [shape: f32[8,32], index: 7, kind: input, shape index: {}]
  %s8 = inlined_call_operand.vmem [shape: f32[8,1], index: 8, kind: input, shape index: {}]
  %s9 = inlined_call_operand.hbm [shape: f32[12,128], index: 9, kind: output, shape index: {}]
  %s10 = sld [smem:[#allocation0]]
  $region46: #{tpu_custom_call.1} parent=0
    _
  %s12 = ssub.s32 1, %s10
  %s13 = scalar_select 0, %s12, %s10
  $region1: #{tpu_custom_call.1} parent=0
    #allocation2 [shape = 'u8[8192]{0}', space=vmem, size = 0x2000, scoped, tag = 'output window, operand 0, single buffered']
    #allocation3 [shape = 's32[1]{0}', space=sflag, size = 0x4, scoped, tag = 'scoped memory for tpu_custom_call.1']
    %14 = vsyncpa [#allocation3], 0
    // Predicated region
    $region2: #{tpu_custom_call.1} parent=1 // pred_check
      _
    $region3: #{tpu_custom_call.1} parent=1 // pred_check_branch
      %16 = sbr.rel (0) target = $region5
    $region4: #{tpu_custom_call.1} parent=1 // pred_region
      _
    $region5: #{tpu_custom_call.1} parent=1 // pred_fallthru
      _
    // Predicated region
    $region6: #{tpu_custom_call.1} parent=1 // pred_check
      _
    $region7: #{tpu_custom_call.1} parent=1 // pred_check_branch
      %18 = sbr.rel (0) target = $region9
    $region8: #{tpu_custom_call.1} parent=1 // pred_region
      _
    $region9: #{tpu_custom_call.1} parent=1 // pred_fallthru
      _
    // Predicated region
    $region10: #{tpu_custom_call.1} parent=1 // pred_check
      _
    $region11: #{tpu_custom_call.1} parent=1 // pred_check_branch
      %20 = sbr.rel (0) target = $region13
    $region12: #{tpu_custom_call.1} parent=1 // pred_region
      _
    $region13: #{tpu_custom_call.1} parent=1 // pred_fallthru
      _
    // Predicated region
    $region14: #{tpu_custom_call.1} parent=1 // pred_check
      _
    $region15: #{tpu_custom_call.1} parent=1 // pred_check_branch
      %22 = sbr.rel (0) target = $region17
    $region16: #{tpu_custom_call.1} parent=1 // pred_region
      _
    $region17: #{tpu_custom_call.1} parent=1 // pred_fallthru
      _
    // Predicated region
    $region18: #{tpu_custom_call.1} parent=1 // pred_check
      _
    $region19: #{tpu_custom_call.1} parent=1 // pred_check_branch
      %24 = sbr.rel (0) target = $region21
    $region20: #{tpu_custom_call.1} parent=1 // pred_region
      _
    $region21: #{tpu_custom_call.1} parent=1 // pred_fallthru
      _
    // Predicated region
    $region22: #{tpu_custom_call.1} parent=1 // pred_check
      _
    $region23: #{tpu_custom_call.1} parent=1 // pred_check_branch
      %26 = sbr.rel (0) target = $region25
    $region24: #{tpu_custom_call.1} parent=1 // pred_region
      _
    $region25: #{tpu_custom_call.1} parent=1 // pred_fallthru
      _
    // Predicated region
    $region26: #{tpu_custom_call.1} parent=1 // pred_check
      _
    $region27: #{tpu_custom_call.1} parent=1 // pred_check_branch
      %28 = sbr.rel (0) target = $region29
    $region28: #{tpu_custom_call.1} parent=1 // pred_region
      _
    $region29: #{tpu_custom_call.1} parent=1 // pred_fallthru
      _
    // Predicated region
    $region30: #{tpu_custom_call.1} parent=1 // pred_check
      _
    $region31: #{tpu_custom_call.1} parent=1 // pred_check_branch
      %30 = sbr.rel (0) target = $region33
    $region32: #{tpu_custom_call.1} parent=1 // pred_region
      _
    $region33: #{tpu_custom_call.1} parent=1 // pred_fallthru
      _
    // Predicated region
    $region34: #{tpu_custom_call.1} parent=1 // pred_check
      _
    $region35: #{tpu_custom_call.1} parent=1 // pred_check_branch
      %32 = sbr.rel (0) target = $region37
    $region36: #{tpu_custom_call.1} parent=1 // pred_region
      _
    $region37: #{tpu_custom_call.1} parent=1 // pred_fallthru
      _
    %v33 = vld [vmem:[%s0] sm:$0xff]
    %v34 = vld [vmem:[%s0 + $0x8] sm:$0xff]
    %v35 = vld [vmem:[%s1] sm:$0xff]
    %v36 = vld [vmem:[%s1 + $0x8] sm:$0xff]
    %v37 = vld [vmem:[%s1 + $0x10] sm:$0xff]
    %v38 = vld [vmem:[%s1 + $0x18] sm:$0xff]
    %v39 = vld [vmem:[%s2] sm:$0xff]
    %v40 = vld [vmem:[%s2 + $0x8] sm:$0xff]
    %v41 = vld [vmem:[%s2 + $0x10] sm:$0xff]
    %v42 = vld [vmem:[%s2 + $0x18] sm:$0xff]
    %44 = vset.pattern.permute.xlu0 0
    %45 = vperm.xlu0 %44, %v39
    %v46 = vpop.permute.xlu0 %45
    %49 = vset.pattern.permute.xlu0 0
    %50 = vperm.xlu0 %49, %v40
    %v51 = vpop.permute.xlu0 %50
    %54 = vset.pattern.permute.xlu0 0
    %55 = vperm.xlu0 %54, %v41
    %v56 = vpop.permute.xlu0 %55
    %59 = vset.pattern.permute.xlu0 0
    %60 = vperm.xlu0 %59, %v42
    %v61 = vpop.permute.xlu0 %60
    %vm63 = vcmask 130048
    %v65 = vsel %vm63, %v35, 0
    %v68 = vsel %vm63, %v36, 0
    %v71 = vsel %vm63, %v37, 0
    %v74 = vsel %vm63, %v38, 0
    %76 = vmatpush.msra.mxu0 0.0
    %77 = vmatpush.msra.mxu0 0.0
    %78 = vmatpush.msra.mxu0 0.0
    %79 = vmatpush.msra.mxu0 0.0
    %80 = vmatpush.msra.mxu0 0.0
    %81 = vmatpush.msra.mxu0 0.0
    %82 = vmatpush.msra.mxu0 0.0
    %83 = vmatpush.msra.mxu0 0.0
    %84 = vmatpush.msra.mxu0 0.0
    %85 = vmatpush.msra.mxu0 0.0
    %86 = vmatpush.msra.mxu0 0.0
    %87 = vmatpush.msra.mxu0 0.0
    %88 = vmatpush.msra.mxu0 0.0
    %89 = vmatpush.msra.mxu0 0.0
    %90 = vmatpush.msra.mxu0 %v34
    %91 = vmatpush.msra.mxu0 %v33
    %92 = vmatmul.f32.gmra.mxu0 %v65
    %v93 = vpop.f32.mrf.mxu0
    %v94 = vadd.f32 %v46, %v93
    %95 = vmatmul.f32.gmra.mxu0 %v68
    %v96 = vpop.f32.mrf.mxu0
    %v97 = vadd.f32 %v51, %v96
    %98 = vmatmul.f32.gmra.mxu0 %v71
    %v99 = vpop.f32.mrf.mxu0
    %v100 = vadd.f32 %v56, %v99
    %101 = vmatmul.f32.gmra.mxu0 %v74
    %v102 = vpop.f32.mrf.mxu0
    %v103 = vadd.f32 %v61, %v102
    %104 = vdwg.mxu0
    %v105 = vmul.f32 %v94, 0.5
    %v106 = vmul.f32 %v97, 0.5
    %v107 = vmul.f32 %v100, 0.5
    %v108 = vmul.f32 %v103, 0.5
    %v109 = vtanh.pop %v105
    %v110 = vtanh.pop %v106
    %v111 = vtanh.pop %v107
    %v112 = vtanh.pop %v108
    %v113 = vmul.f32 %v109, 0.5
    %v114 = vmul.f32 %v110, 0.5
    %v115 = vmul.f32 %v111, 0.5
    %v116 = vmul.f32 %v112, 0.5
    %v117 = vadd.f32 %v113, 0.5
    %v118 = vadd.f32 %v114, 0.5
    %v119 = vadd.f32 %v115, 0.5
    %v120 = vadd.f32 %v116, 0.5
    %v121 = vld [vmem:[%s3] sm:$0xff]
    %v122 = vld [vmem:[%s3 + $0x8] sm:$0xff]
    %v123 = vld [vmem:[%s3 + $0x10] sm:$0xff]
    %v124 = vld [vmem:[%s3 + $0x18] sm:$0xff]
    %v125 = vld [vmem:[%s3 + $0x20] sm:$0xf]
    %v126 = vld [vmem:[%s4] sm:$0xff]
    %v127 = vld [vmem:[%s4 + $0x8] sm:$0xff]
    %v128 = vld [vmem:[%s4 + $0x10] sm:$0xff]
    %v129 = vld [vmem:[%s4 + $0x18] sm:$0xff]
    %v130 = vld [vmem:[%s4 + $0x20] sm:$0xf]
    %132 = vset.pattern.permute.xlu0 0
    %133 = vperm.xlu0 %132, %v126
    %v134 = vpop.permute.xlu0 %133
    %137 = vset.pattern.permute.xlu0 0
    %138 = vperm.xlu0 %137, %v127
    %v139 = vpop.permute.xlu0 %138
    %142 = vset.pattern.permute.xlu0 0
    %143 = vperm.xlu0 %142, %v128
    %v144 = vpop.permute.xlu0 %143
    %147 = vset.pattern.permute.xlu0 0
    %148 = vperm.xlu0 %147, %v129
    %v149 = vpop.permute.xlu0 %148
    %152 = vset.pattern.permute.xlu0 0
    %153 = vperm.xlu0 %152, %v130
    %v154 = vpop.permute.xlu0 %153
    %vm156 = vcmask 261120
    %v158 = vsel %vm156, %v121, 0
    %v161 = vsel %vm156, %v122, 0
    %v164 = vsel %vm156, %v123, 0
    %v167 = vsel %vm156, %v124, 0
    %v170 = vsel %vm156, %v125, 0
    %172 = vmatpush.msra.mxu0 0.0
    %173 = vmatpush.msra.mxu0 0.0
    %174 = vmatpush.msra.mxu0 0.0
    %175 = vmatpush.msra.mxu0 0.0
    %176 = vmatpush.msra.mxu0 0.0
    %177 = vmatpush.msra.mxu0 0.0
    %178 = vmatpush.msra.mxu0 0.0
    %179 = vmatpush.msra.mxu0 0.0
    %180 = vmatpush.msra.mxu0 0.0
    %181 = vmatpush.msra.mxu0 0.0
    %182 = vmatpush.msra.mxu0 0.0
    %183 = vmatpush.msra.mxu0 0.0
    %184 = vmatpush.msra.mxu0 %v120
    %185 = vmatpush.msra.mxu0 %v119
    %186 = vmatpush.msra.mxu0 %v118
    %187 = vmatpush.msra.mxu0 %v117
    %188 = vmatmul.f32.gmra.mxu0 %v158
    %v189 = vpop.f32.mrf.mxu0
    %v190 = vadd.f32 %v134, %v189
    %191 = vmatmul.f32.gmra.mxu0 %v161
    %v192 = vpop.f32.mrf.mxu0
    %v193 = vadd.f32 %v139, %v192
    %194 = vmatmul.f32.gmra.mxu0 %v164
    %v195 = vpop.f32.mrf.mxu0
    %v196 = vadd.f32 %v144, %v195
    %197 = vmatmul.f32.gmra.mxu0 %v167
    %v198 = vpop.f32.mrf.mxu0
    %v199 = vadd.f32 %v149, %v198
    %200 = vmatmul.f32.gmra.mxu0 %v170
    %v201 = vpop.f32.mrf.mxu0
    %v202 = vadd.f32 %v154, %v201
    %203 = vdwg.mxu0
    %v204 = vmul.f32 %v190, 0.5
    %v205 = vmul.f32 %v193, 0.5
    %v206 = vmul.f32 %v196, 0.5
    %v207 = vmul.f32 %v199, 0.5
    %v208 = vmul.f32 %v202, 0.5
    %v209 = vtanh.pop %v204
    %v210 = vtanh.pop %v205
    %v211 = vtanh.pop %v206
    %v212 = vtanh.pop %v207
    %v213 = vtanh.pop %v208
    %v214 = vmul.f32 %v209, 0.5
    %v215 = vmul.f32 %v210, 0.5
    %v216 = vmul.f32 %v211, 0.5
    %v217 = vmul.f32 %v212, 0.5
    %v218 = vmul.f32 %v213, 0.5
    %v219 = vadd.f32 %v214, 0.5
    %v220 = vadd.f32 %v215, 0.5
    %v221 = vadd.f32 %v216, 0.5
    %v222 = vadd.f32 %v217, 0.5
    %v223 = vadd.f32 %v218, 0.5
    %v224 = vld [vmem:[%s5] sm:$0xff]
    %v225 = vld [vmem:[%s5 + $0x8] sm:$0xff]
    %v226 = vld [vmem:[%s5 + $0x10] sm:$0xff]
    %v227 = vld [vmem:[%s5 + $0x18] sm:$0xff]
    %v228 = vld [vmem:[%s6] sm:$0xff]
    %v229 = vld [vmem:[%s6 + $0x8] sm:$0xff]
    %v230 = vld [vmem:[%s6 + $0x10] sm:$0xff]
    %v231 = vld [vmem:[%s6 + $0x18] sm:$0xff]
    %233 = vset.pattern.permute.xlu0 0
    %234 = vperm.xlu0 %233, %v228
    %v235 = vpop.permute.xlu0 %234
    %238 = vset.pattern.permute.xlu0 0
    %239 = vperm.xlu0 %238, %v229
    %v240 = vpop.permute.xlu0 %239
    %243 = vset.pattern.permute.xlu0 0
    %244 = vperm.xlu0 %243, %v230
    %v245 = vpop.permute.xlu0 %244
    %248 = vset.pattern.permute.xlu0 0
    %249 = vperm.xlu0 %248, %v231
    %v250 = vpop.permute.xlu0 %249
    %vm252 = vcmask 293888
    %v254 = vsel %vm252, %v224, 0
    %v257 = vsel %vm252, %v225, 0
    %v260 = vsel %vm252, %v226, 0
    %v263 = vsel %vm252, %v227, 0
    %vm265 = vcmask 1043456
    %v267 = vsel %vm265, %v223, 0
    %269 = vmatpush.msra.mxu0 0.0
    %270 = vmatpush.msra.mxu0 0.0
    %271 = vmatpush.msra.mxu0 0.0
    %272 = vmatpush.msra.mxu0 0.0
    %273 = vmatpush.msra.mxu0 0.0
    %274 = vmatpush.msra.mxu0 0.0
    %275 = vmatpush.msra.mxu0 0.0
    %276 = vmatpush.msra.mxu0 0.0
    %277 = vmatpush.msra.mxu0 0.0
    %278 = vmatpush.msra.mxu0 0.0
    %279 = vmatpush.msra.mxu0 0.0
    %280 = vmatpush.msra.mxu0 %v267
    %281 = vmatpush.msra.mxu0 %v222
    %282 = vmatpush.msra.mxu0 %v221
    %283 = vmatpush.msra.mxu0 %v220
    %284 = vmatpush.msra.mxu0 %v219
    %285 = vmatmul.f32.gmra.mxu0 %v254
    %v286 = vpop.f32.mrf.mxu0
    %v287 = vadd.f32 %v235, %v286
    %288 = vmatmul.f32.gmra.mxu0 %v257
    %v289 = vpop.f32.mrf.mxu0
    %v290 = vadd.f32 %v240, %v289
    %291 = vmatmul.f32.gmra.mxu0 %v260
    %v292 = vpop.f32.mrf.mxu0
    %v293 = vadd.f32 %v245, %v292
    %294 = vmatmul.f32.gmra.mxu0 %v263
    %v295 = vpop.f32.mrf.mxu0
    %v296 = vadd.f32 %v250, %v295
    %297 = vdwg.mxu0
    %v298 = vmul.f32 %v287, 0.5
    %v299 = vmul.f32 %v290, 0.5
    %v300 = vmul.f32 %v293, 0.5
    %v301 = vmul.f32 %v296, 0.5
    %v302 = vtanh.pop %v298
    %v303 = vtanh.pop %v299
    %v304 = vtanh.pop %v300
    %v305 = vtanh.pop %v301
    %v306 = vmul.f32 %v302, 0.5
    %v307 = vmul.f32 %v303, 0.5
    %v308 = vmul.f32 %v304, 0.5
    %v309 = vmul.f32 %v305, 0.5
    %v310 = vadd.f32 %v306, 0.5
    %v311 = vadd.f32 %v307, 0.5
    %v312 = vadd.f32 %v308, 0.5
    %v313 = vadd.f32 %v309, 0.5
    %v314 = vld [vmem:[%s7] sm:$0xff]
    %v315 = vld [vmem:[%s8] sm:$0xff]
    %317 = vset.pattern.permute.xlu0 0
    %318 = vperm.xlu0 %317, %v315
    %v319 = vpop.permute.xlu0 %318
    %v322 = vsel %vm156, %v314, 0
    %324 = vmatpush.msra.mxu0 0.0
    %325 = vmatpush.msra.mxu0 0.0
    %326 = vmatpush.msra.mxu0 0.0
    %327 = vmatpush.msra.mxu0 0.0
    %328 = vmatpush.msra.mxu0 0.0
    %329 = vmatpush.msra.mxu0 0.0
    %330 = vmatpush.msra.mxu0 0.0
    %331 = vmatpush.msra.mxu0 0.0
    %332 = vmatpush.msra.mxu0 0.0
    %333 = vmatpush.msra.mxu0 0.0
    %334 = vmatpush.msra.mxu0 0.0
    %335 = vmatpush.msra.mxu0 0.0
    %336 = vmatpush.msra.mxu0 %v313
    %337 = vmatpush.msra.mxu0 %v312
    %338 = vmatpush.msra.mxu0 %v311
    %339 = vmatpush.msra.mxu0 %v310
    %340 = vmatmul.f32.gmra.mxu0 %v322
    %v341 = vpop.f32.mrf.mxu0
    %v342 = vadd.f32 %v319, %v341
    %343 = vdwg.mxu0
    %v345 = vrot.slane %v342, 4
    %v347 = vsel %vm265, %v223, %v345
    %348 = vst [vmem:[#allocation2] sm:$0xff] %v347
    %349 = vst [vmem:[#allocation2 + $0x8] sm:$0xf] %v345
    // Predicated region
    $region38: #{tpu_custom_call.1} parent=1 // pred_check
      _
    $region39: #{tpu_custom_call.1} parent=1 // pred_check_branch
      %351 = sbr.rel (0) target = $region41
    $region40: #{tpu_custom_call.1} parent=1 // pred_region
      %353 = vsyncadd [#allocation3], 0
      %s354 = sshll.u32 [#allocation2], 4
      %s355 = int_to_ptr.vmem [resolvable:$true] %s354
      %s356 = sshll.u32 %s9, 4
      %s357 = int_to_ptr.hbm [resolvable:$true] %s356
      %362 = dma.vmem_to_hbm [thread:$0]  %s355, 256, %s357, [#allocation3], 128, 128, 8
    $region41: #{tpu_custom_call.1} parent=1 // pred_fallthru
      _
    // Predicated region
    $region42: #{tpu_custom_call.1} parent=1 // pred_check
      _
    $region43: #{tpu_custom_call.1} parent=1 // pred_check_branch
      %364 = sbr.rel (0) target = $region45
    $region44: #{tpu_custom_call.1} parent=1 // pred_region
      %366 = dma.done [#allocation3], 256
    $region45: #{tpu_custom_call.1} parent=1 // pred_fallthru
      _
    %367 = vsyncpa [#allocation3], 1

</llo_original>
